<compile_context>
chip_gen: v6e
topology: v6e:2x2x1
jax: 0.10.0
libtpu: 0.0.40
codegen_flags: <defaults>
</compile_context>

<pallas_src>
import functools
import math

import jax
import jax.numpy as jnp
from jax.experimental import pallas as pl
from jax.experimental.pallas import tpu as pltpu


def make_pe_table(d_model: int, max_len: int = 5000) -> jnp.ndarray:
    """Positional-encoding buffer, identical to the PyTorch __init__: (max_len, 1, d_model)."""
    assert d_model % 2 == 0, "PositionalEncoding requires an even d_model"
    position = jnp.arange(0, max_len, dtype=jnp.float32)[:, None]             # (max_len, 1)
    div_term = jnp.exp(
        jnp.arange(0, d_model, 2, dtype=jnp.float32) * (-math.log(10000.0) / d_model)
    )                                                                          # (d_model/2,)
    pe = jnp.zeros((max_len, d_model), dtype=jnp.float32)
    pe = pe.at[:, 0::2].set(jnp.sin(position * div_term))
    pe = pe.at[:, 1::2].set(jnp.cos(position * div_term))
    # unsqueeze(0).transpose(0, 1)  ->  (max_len, 1, d_model)
    return pe[:, None, :]


def _pe_add_kernel(x_ref, pe_ref, o_ref, *, batch: int):
    # x_ref: (TS, B*D), pe_ref: (TS, D) -> repeat pe across the B groups on the lane axis.
    pe = pe_ref[...]
    if batch > 1:
        pe = jnp.tile(pe, (1, batch))                 # (TS, B*D)
    o_ref[...] = (x_ref[...] + pe).astype(o_ref.dtype)


def _choose_seq_tile(S: int, row_bytes: int, target_bytes: int = 1 << 20) -> int:
    """Sequence tile: multiple of 8 (or the full S), ~<=1 MiB of x per tile, and at
    least 2 grid steps when S allows (so the v7x megacore can split the grid)."""
    if S <= 8:
        return S                                      # full-dim block is always legal
    ts = (target_bytes // max(row_bytes, 1)) // 8 * 8
    ts = max(8, min(ts, S))
    if ts >= S and S >= 16:                           # force >=2 grid steps
        ts = max(8, (S // 2) // 8 * 8)
    return ts


def positional_encoding_forward(x: jnp.ndarray, pe_table: jnp.ndarray) -> jnp.ndarray:
    """x: (S, B, D); pe_table: (max_len, 1, D). Returns x + pe_table[:S] (broadcast over B)."""
    S, B, D = x.shape
    assert pe_table.shape[0] >= S and pe_table.shape[2] == D

    # Lane-dense 2-D views (free row-major reshapes / static slice, no data movement).
    x2 = x.reshape(S, B * D)
    pe2 = pe_table[:S, 0, :].astype(x.dtype)          # (S, D); match x dtype (bf16 halves traffic)

    ts = _choose_seq_tile(S, B * D * x.dtype.itemsize)
    grid = (pl.cdiv(S, ts),)

    out2 = pl.pallas_call(
        functools.partial(_pe_add_kernel, batch=B),
        out_shape=jax.ShapeDtypeStruct((S, B * D), x.dtype),
        grid_spec=pl.GridSpec(
            grid=grid,
            in_specs=[
                pl.BlockSpec((ts, B * D), lambda i: (i, 0)),
                pl.BlockSpec((ts, D), lambda i: (i, 0)),
            ],
            out_specs=pl.BlockSpec((ts, B * D), lambda i: (i, 0)),
        ),
        compiler_params=pltpu.CompilerParams(
            dimension_semantics=("parallel",),         # S-tiles shard across TensorCores on v7x
            vmem_limit_bytes=32 * 1024 * 1024,
        ),
    )(x2, pe2)

    return out2.reshape(S, B, D)


if __name__ == "__main__":
    # Small demo, but lane-aligned: B*D = 256 lanes, S split into two tiles of 8 rows.
    seq_len, batch, d_model = 16, 2, 128
    max_len = 64

    key = jax.random.PRNGKey(0)
    x = jax.random.normal(key, (seq_len, batch, d_model), dtype=jnp.float32)

    pe = make_pe_table(d_model, max_len=max_len)

    out = jax.block_until_ready(positional_encoding_forward(x, pe))

    # Sanity check against the pure-JAX reference (same math as the PyTorch forward).
    ref = x + pe[:seq_len]
    assert out.shape == (seq_len, batch, d_model)
    assert jnp.allclose(out, ref, atol=1e-6, rtol=1e-6)

    print("KERNEL_OK")
</pallas_src>

<mosaic_0001>
module attributes {stable_mosaic.version = 11 : i64} {
  func.func @_pe_add_kernel(%arg0: i32, %arg1: memref<8x256xf32, #tpu.memory_space<vmem>>, %arg2: memref<8x128xf32, #tpu.memory_space<vmem>>, %arg3: memref<8x256xf32, #tpu.memory_space<vmem>>) attributes {dimension_semantics = [#tpu.dimension_semantics<parallel>], iteration_bounds = array<i64: 2>, scalar_prefetch = 0 : i64, scratch_operands = 0 : i64, tpu.core_type = #tpu.core_type<tc>, window_params = [{transform_indices = @transform_0, window_bounds = array<i64: 8, 256>}, {transform_indices = @transform_1, window_bounds = array<i64: 8, 128>}, {transform_indices = @transform_2, window_bounds = array<i64: 8, 256>}]} {
    %c0 = arith.constant 0 : index
    %c0_0 = arith.constant 0 : index
    %0 = vector.load %arg2[%c0, %c0_0] : memref<8x128xf32, #tpu.memory_space<vmem>>, vector<8x128xf32>
    %1 = tpu.concatenate %0, %0 in 1 : vector<8x128xf32>, vector<8x128xf32> -> vector<8x256xf32>
    %c0_1 = arith.constant 0 : index
    %c0_2 = arith.constant 0 : index
    %2 = vector.load %arg1[%c0_1, %c0_2] : memref<8x256xf32, #tpu.memory_space<vmem>>, vector<8x256xf32>
    %3 = arith.addf %2, %1 : vector<8x256xf32>
    %c0_3 = arith.constant 0 : index
    %c0_4 = arith.constant 0 : index
    %4 = vector.load %arg3[%c0_3, %c0_4] : memref<8x256xf32, #tpu.memory_space<vmem>>, vector<8x256xf32>
    tpu.vector_store %arg3[%c0_3, %c0_4], %3 {strides = array<i32>} : memref<8x256xf32, #tpu.memory_space<vmem>>, vector<8x256xf32>,
    return
  }
  func.func @transform_0(%arg0: i32) -> (i32, i32) {
    %c0_i32 = arith.constant 0 : i32
    %c0_i32_0 = arith.constant 0 : i32
    return %arg0, %c0_i32 : i32, i32
  }
  func.func @transform_1(%arg0: i32) -> (i32, i32) {
    %c0_i32 = arith.constant 0 : i32
    %c0_i32_0 = arith.constant 0 : i32
    return %arg0, %c0_i32 : i32, i32
  }
  func.func @transform_2(%arg0: i32) -> (i32, i32) {
    %c0_i32 = arith.constant 0 : i32
    %c0_i32_0 = arith.constant 0 : i32
    return %arg0, %c0_i32 : i32, i32
  }
}

</mosaic_0001>

<llo_original>
// kernel: tpu_custom_call.1
$region0: #{tpu_custom_call.1}
  #allocation0 [shape = 'u32[]', space=smem, size = 0x4, offset = 0x4, fixed_abs, tag = 'smem constant byte address 0x4 - core index']
  #allocation1 [shape = 'u32[144,128]{1,0:T(1,128)}', space=vmem, size = 0x12000, scoped, tag = 'internal scratch']
  %s0 = inlined_call_operand.hbm [shape: f32[16,256], index: 0, kind: input, shape index: {}]
  %s1 = inlined_call_operand.hbm [shape: f32[16,128], index: 1, kind: input, shape index: {}]
  %s2 = inlined_call_operand.hbm [shape: f32[16,256], index: 2, kind: output, shape index: {}]
  %s3 = sld [smem:[#allocation0]]
  $region49: #{tpu_custom_call.1} parent=0
    _
  %s5 = ssub.s32 1, %s3
  %s6 = scalar_select 0, %s5, %s3
  $region1: #{tpu_custom_call.1} parent=0
    #allocation2 [shape = 'u8[16384]{0}', space=vmem, size = 0x4000, scoped, tag = 'input window, operand 0']
    #allocation3 [shape = 's32[2]{0}', space=sflag, size = 0x8, scoped, tag = 'scoped memory for tpu_custom_call.1']
    #allocation4 [shape = 's32[2]{0}', space=sflag, size = 0x8, scoped, tag = 'scoped memory for tpu_custom_call.1']
    #allocation5 [shape = 'u8[8192]{0}', space=vmem, size = 0x2000, scoped, tag = 'input window, operand 1']
    #allocation6 [shape = 's32[2]{0}', space=sflag, size = 0x8, scoped, tag = 'scoped memory for tpu_custom_call.1']
    #allocation7 [shape = 'u8[16384]{0}', space=vmem, size = 0x4000, scoped, tag = 'output window, operand 0']
    %7 = vsyncpa [#allocation3], 0
    %s8 = scalar_lea.sflag [#allocation3], 1
    %9 = vsyncpa %s8, 0
    %10 = vsyncpa [#allocation6], 0
    %s11 = scalar_lea.sflag [#allocation6], 1
    %12 = vsyncpa %s11, 0
    %13 = vsyncpa [#allocation4], 0
    %s14 = scalar_lea.sflag [#allocation4], 1
    %15 = vsyncpa %s14, 0
    loop: start=0, step=1, limit=4
    $region2: #{tpu_custom_call.1} parent=1 // loop_pre_header
      _
    $region3: #{tpu_custom_call.1} parent=1 // loop_header
      %s17 = sphi 0, %s21
      %p18 = scmp.ge.s32.totalorder %s17, 4
      %s27 = sphi 0, %s29
      %s30 = sphi 0, %s27
      %s31 = sphi 0, %s30
      %s47 = sphi 0, %s31
      %s53 = sphi 0, %s55
      %s56 = sphi 0, %s53
      %s57 = sphi 0, %s56
      %s73 = sphi 0, %s57
      %s79 = sphi 0, %s81
      %s82 = sphi 0, %s79
      %s83 = sphi 0, %s82
      %s99 = sphi 0, %s83
    $region4: #{tpu_custom_call.1} parent=1 // loop_header_branch
      %20 = sbr.rel (%p18) target = $region8
    $region5: #{tpu_custom_call.1} parent=1 // loop_body
      %s22 = ssub.s32 %s17, 1
      %s23 = ssub.s32 %s17, 2
      %s24 = sadd.s32 %s17, 1
      %s25 = ssub.s32 %s17, %s24
      %p26 = scmp.eq.s32.totalorder %s25, 0
      %s28 = sadd.s32 %s27, 1
      %s29 = scalar_select %p26, %s27, %s28
      %p32 = pneg %p26
      %p33 = scmp.eq.s32.totalorder %s17, 1
      %p34 = por %p32, %p33
      %p35 = scmp.ne.s32.totalorder %s27, %s30
      %p36 = scmp.eq.s32.totalorder %s17, 0
      %p37 = por %p35, %p36
      %p38 = scmp.ne.s32.totalorder %s27, %s30
      %p39 = scmp.eq.s32.totalorder %s22, 1
      %p40 = por %p38, %p39
      %p41 = scmp.ne.s32.totalorder %s30, %s31
      %p42 = scmp.eq.s32.totalorder %s22, 0
      %p43 = por %p41, %p42
      %p44 = scmp.ne.s32.totalorder %s30, %s31
      %p45 = scmp.eq.s32.totalorder %s23, 1
      %p46 = por %p44, %p45
      %p48 = scmp.ne.s32.totalorder %s31, %s47
      %p49 = scmp.eq.s32.totalorder %s23, 0
      %p50 = por %p48, %p49
      %s51 = ssub.s32 %s17, %s24
      %p52 = scmp.eq.s32.totalorder %s51, 0
      %s54 = sadd.s32 %s53, 1
      %s55 = scalar_select %p52, %s53, %s54
      %p58 = pneg %p52
      %p59 = scmp.eq.s32.totalorder %s17, 1
      %p60 = por %p58, %p59
      %p61 = scmp.ne.s32.totalorder %s53, %s56
      %p62 = scmp.eq.s32.totalorder %s17, 0
      %p63 = por %p61, %p62
      %p64 = scmp.ne.s32.totalorder %s53, %s56
      %p65 = scmp.eq.s32.totalorder %s22, 1
      %p66 = por %p64, %p65
      %p67 = scmp.ne.s32.totalorder %s56, %s57
      %p68 = scmp.eq.s32.totalorder %s22, 0
      %p69 = por %p67, %p68
      %p70 = scmp.ne.s32.totalorder %s56, %s57
      %p71 = scmp.eq.s32.totalorder %s23, 1
      %p72 = por %p70, %p71
      %p74 = scmp.ne.s32.totalorder %s57, %s73
      %p75 = scmp.eq.s32.totalorder %s23, 0
      %p76 = por %p74, %p75
      %s77 = ssub.s32 %s17, %s24
      %p78 = scmp.eq.s32.totalorder %s77, 0
      %s80 = sadd.s32 %s79, 1
      %s81 = scalar_select %p78, %s79, %s80
      %p84 = pneg %p78
      %p85 = scmp.eq.s32.totalorder %s17, 1
      %p86 = por %p84, %p85
      %p87 = scmp.ne.s32.totalorder %s79, %s82
      %p88 = scmp.eq.s32.totalorder %s17, 0
      %p89 = por %p87, %p88
      %p90 = scmp.ne.s32.totalorder %s79, %s82
      %p91 = scmp.eq.s32.totalorder %s22, 1
      %p92 = por %p90, %p91
      %p93 = scmp.ne.s32.totalorder %s82, %s83
      %p94 = scmp.eq.s32.totalorder %s22, 0
      %p95 = por %p93, %p94
      %p96 = scmp.ne.s32.totalorder %s82, %s83
      %p97 = scmp.eq.s32.totalorder %s23, 1
      %p98 = por %p96, %p97
      %p100 = scmp.ne.s32.totalorder %s83, %s99
      %p101 = scmp.eq.s32.totalorder %s23, 0
      %p102 = por %p100, %p101
      %p103 = scmp.le.s32.totalorder 1, %s17
      %p104 = scmp.lt.s32.totalorder %s17, 3
      %p105 = pnand %p103, %p104
      %p106 = pneg %p105
      // Predicated region
      $region9: #{tpu_custom_call.1} parent=5 // pred_check
        _
      $region10: #{tpu_custom_call.1} parent=5 // pred_check_branch
        %108 = sbr.rel (%p105) target = $region12
      $region11: #{tpu_custom_call.1} parent=5 // pred_region
        %s109 = ssub.s32 %s17, 1
      $region12: #{tpu_custom_call.1} parent=5 // pred_fallthru
        _
      %p110 = scmp.lt.s32.totalorder %s17, 2
      // Predicated region
      $region13: #{tpu_custom_call.1} parent=5 // pred_check
        %p111 = pneg %p110
      $region14: #{tpu_custom_call.1} parent=5 // pred_check_branch
        %113 = sbr.rel (%p111) target = $region16
      $region15: #{tpu_custom_call.1} parent=5 // pred_region
        // Predicated region
        $region17: #{tpu_custom_call.1} parent=15 // pred_check
          %p114 = pneg %p37
        $region18: #{tpu_custom_call.1} parent=15 // pred_check_branch
          %116 = sbr.rel (%p114) target = $region20
        $region19: #{tpu_custom_call.1} parent=15 // pred_region
          %s117 = sand.u32 %s27, 1
          %s118 = scalar_lea.sflag [#allocation3], %s117
          %s119 = sand.u32 %s27, 1
          %s120 = smul.addr %s119, 16
          %s121 = scalar_lea.vmem [#allocation2], %s120
          %s123 = ssub.s32 256, 256
          %124 = vsyncadd %s118, %s123
          %s125 = smul.addr %s17, 2
          %s126 = smul.addr %s125, 128
          %s127 = scalar_lea.hbm %s0, %s126
          %s129 = sshll.u32 %s121, 4
          %s130 = int_to_ptr.vmem [resolvable:$true] %s129
          %132 = dma.hbm_to_vmem [thread:$0]  %s127, 256, %s130, %s118
        $region20: #{tpu_custom_call.1} parent=15 // pred_fallthru
          _
        // Predicated region
        $region21: #{tpu_custom_call.1} parent=15 // pred_check
          %p133 = pneg %p63
        $region22: #{tpu_custom_call.1} parent=15 // pred_check_branch
          %135 = sbr.rel (%p133) target = $region24
        $region23: #{tpu_custom_call.1} parent=15 // pred_region
          %s136 = sand.u32 %s53, 1
          %s137 = scalar_lea.sflag [#allocation6], %s136
          %s138 = sand.u32 %s53, 1
          %s139 = smul.addr %s138, 8
          %s140 = scalar_lea.vmem [#allocation5], %s139
          %s142 = ssub.s32 128, 128
          %143 = vsyncadd %s137, %s142
          %s144 = smul.addr %s17, 128
          %s145 = scalar_lea.hbm %s1, %s144
          %s147 = sshll.u32 %s140, 4
          %s148 = int_to_ptr.vmem [resolvable:$true] %s147
          %150 = dma.hbm_to_vmem [thread:$0]  %s145, 128, %s148, %s137
        $region24: #{tpu_custom_call.1} parent=15 // pred_fallthru
          _
      $region16: #{tpu_custom_call.1} parent=5 // pred_fallthru
        _
      %p151 = scmp.le.s32.totalorder 1, %s17
      %p152 = scmp.lt.s32.totalorder %s17, 3
      %p153 = pnand %p151, %p152
      %p154 = pneg %p153
      // Predicated region
      $region25: #{tpu_custom_call.1} parent=5 // pred_check
        _
      $region26: #{tpu_custom_call.1} parent=5 // pred_check_branch
        %156 = sbr.rel (%p153) target = $region28
      $region27: #{tpu_custom_call.1} parent=5 // pred_region
        %s157 = ssub.s32 %s17, 1
        %s158 = sand.u32 %s30, 1
        %s159 = scalar_lea.sflag [#allocation3], %s158
        %s160 = sand.u32 %s30, 1
        %s161 = smul.addr %s160, 16
        %s162 = scalar_lea.vmem [#allocation2], %s161
        // Predicated region
        $region29: #{tpu_custom_call.1} parent=27 // pred_check
          %p163 = pneg %p43
        $region30: #{tpu_custom_call.1} parent=27 // pred_check_branch
          %165 = sbr.rel (%p163) target = $region32
        $region31: #{tpu_custom_call.1} parent=27 // pred_region
          %166 = dma.done %s159, 256
        $region32: #{tpu_custom_call.1} parent=27 // pred_fallthru
          _
        %s167 = sand.u32 %s56, 1
        %s168 = scalar_lea.sflag [#allocation6], %s167
        %s169 = sand.u32 %s56, 1
        %s170 = smul.addr %s169, 8
        %s171 = scalar_lea.vmem [#allocation5], %s170
        // Predicated region
        $region33: #{tpu_custom_call.1} parent=27 // pred_check
          %p172 = pneg %p69
        $region34: #{tpu_custom_call.1} parent=27 // pred_check_branch
          %174 = sbr.rel (%p172) target = $region36
        $region35: #{tpu_custom_call.1} parent=27 // pred_region
          %175 = dma.done %s168, 128
        $region36: #{tpu_custom_call.1} parent=27 // pred_fallthru
          _
        %s176 = sand.u32 %s30, 1
        %s177 = scalar_lea.sflag [#allocation3], %s176
        %s178 = sand.u32 %s30, 1
        %s179 = smul.addr %s178, 16
        %s180 = scalar_lea.vmem [#allocation2], %s179
        %p181 = pneg %p43
        %p182 = pneg %p40
        %s183 = sand.u32 %s56, 1
        %s184 = scalar_lea.sflag [#allocation6], %s183
        %s185 = sand.u32 %s56, 1
        %s186 = smul.addr %s185, 8
        %s187 = scalar_lea.vmem [#allocation5], %s186
        %p188 = pneg %p69
        %p189 = pneg %p66
        %p190 = pneg %p95
        %p191 = pneg %p92
        %s192 = sand.u32 %s82, 1
        %s193 = scalar_lea.sflag [#allocation4], %s192
        %s194 = sand.u32 %s82, 1
        %s195 = smul.addr %s194, 16
        %s196 = scalar_lea.vmem [#allocation7], %s195
        %v197 = vld [vmem:[%s171] sm:$0xff]
        %v198 = vld [vmem:[%s162] sm:$0xff]
        %v199 = vld [vmem:[%s162 + $0x8] sm:$0xff]
        %v200 = vadd.f32 %v198, %v197
        %v201 = vadd.f32 %v199, %v197
        %202 = vst [vmem:[%s196] sm:$0xff] %v200
        %203 = vst [vmem:[%s196 + $0x8] sm:$0xff] %v201
        %s204 = sand.u32 %s82, 1
        %s205 = scalar_lea.sflag [#allocation4], %s204
        %s206 = sand.u32 %s82, 1
        %s207 = smul.addr %s206, 16
        %s208 = scalar_lea.vmem [#allocation7], %s207
        // Predicated region
        $region37: #{tpu_custom_call.1} parent=27 // pred_check
          %p209 = pneg %p92
        $region38: #{tpu_custom_call.1} parent=27 // pred_check_branch
          %211 = sbr.rel (%p209) target = $region40
        $region39: #{tpu_custom_call.1} parent=27 // pred_region
          %s213 = ssub.s32 256, 256
          %214 = vsyncadd %s205, %s213
          %s215 = smul.addr %s22, 2
          %s216 = smul.addr %s215, 128
          %s217 = scalar_lea.hbm %s2, %s216
          %s219 = sshll.u32 %s208, 4
          %s220 = int_to_ptr.vmem [resolvable:$true] %s219
          %222 = dma.vmem_to_hbm [thread:$0]  %s220, 256, %s217, %s205
        $region40: #{tpu_custom_call.1} parent=27 // pred_fallthru
          _
      $region28: #{tpu_custom_call.1} parent=5 // pred_fallthru
        _
      %p223 = scmp.le.s32.totalorder 2, %s17
      // Predicated region
      $region41: #{tpu_custom_call.1} parent=5 // pred_check
        %p224 = pneg %p223
      $region42: #{tpu_custom_call.1} parent=5 // pred_check_branch
        %226 = sbr.rel (%p224) target = $region44
      $region43: #{tpu_custom_call.1} parent=5 // pred_region
        %s227 = ssub.s32 %s17, 2
        // Predicated region
        $region45: #{tpu_custom_call.1} parent=43 // pred_check
          %p228 = pneg %p98
        $region46: #{tpu_custom_call.1} parent=43 // pred_check_branch
          %230 = sbr.rel (%p228) target = $region48
        $region47: #{tpu_custom_call.1} parent=43 // pred_region
          %s231 = sand.u32 %s83, 1
          %s232 = scalar_lea.sflag [#allocation4], %s231
          %s233 = sand.u32 %s83, 1
          %s234 = smul.addr %s233, 16
          %s235 = scalar_lea.vmem [#allocation7], %s234
          %236 = dma.done %s232, 256
        $region48: #{tpu_custom_call.1} parent=43 // pred_fallthru
          _
      $region44: #{tpu_custom_call.1} parent=5 // pred_fallthru
        _
    $region6: #{tpu_custom_call.1} parent=1 // loop_footer
      %s21 = sadd.s32 1, %s17
    $region7: #{tpu_custom_call.1} parent=1 // loop_footer_branch
      %16 = sbr.rel target = $region3
    $region8: #{tpu_custom_call.1} parent=1 // loop_exit
      _
    %237 = vsyncpa [#allocation3], 1
    %s238 = scalar_lea.sflag [#allocation3], 1
    %239 = vsyncpa %s238, 1
    %240 = vsyncpa [#allocation6], 1
    %s241 = scalar_lea.sflag [#allocation6], 1
    %242 = vsyncpa %s241, 1
    %243 = vsyncpa [#allocation4], 1
    %s244 = scalar_lea.sflag [#allocation4], 1
    %245 = vsyncpa %s244, 1

</llo_original>
